<compile_context>
chip_gen: v7x
topology: tpu7x:2x2x1
jax: 0.10.0
libtpu: 0.0.40
codegen_flags: <defaults>
</compile_context>

<pallas_src>
from functools import partial

import jax
import jax.numpy as jnp
from jax.experimental import pallas as pl
from jax.experimental.pallas import tpu as pltpu


def _exp_log_ce_kernel(x_ref, lab_ref, w_ref, out_ref, acc_ref, *,
                       n_classes, hw, tm, gamma):
    i = pl.program_id(1)

    @pl.when(i == 0)
    def _():
        acc_ref[...] = jnp.zeros_like(acc_ref)

    x = x_ref[...].astype(jnp.float32)          # (C, TM) logits (upcast in VMEM)
    lab = lab_ref[...]                          # (1, TM) int32 labels
    w = w_ref[...].astype(jnp.float32)          # (1, TM) class_weight[label]

    # numerically-stable log-softmax over the class (sublane) axis,
    # gathered at the label with a select (no f32 one-hot temporaries)
    class_ids = jax.lax.broadcasted_iota(jnp.int32, (n_classes, tm), 0)
    is_tgt = class_ids == lab                                          # (C, TM) bool
    m = jnp.max(x, axis=0, keepdims=True)                              # (1, TM)
    lse = m + jnp.log(jnp.sum(jnp.exp(x - m), axis=0, keepdims=True))  # (1, TM)
    x_tgt = jnp.sum(jnp.where(is_tgt, x, 0.0), axis=0, keepdims=True)  # (1, TM)
    neg_logp = lse - x_tgt                                             # -log_softmax[label]

    # (-log p).clamp_min(1e-9) ** gamma   (skip the pow entirely when gamma == 1)
    base = jnp.maximum(neg_logp, 1e-9)
    val = base if gamma == 1.0 else jnp.power(base, gamma)
    val = val * w

    # mask pixels past HW (partial last tile / unspecified padding lanes);
    # select (not multiply) so garbage/NaN in padded lanes never propagates.
    lane = jax.lax.broadcasted_iota(jnp.int32, (1, tm), 1)
    valid = (i * tm + lane) < hw
    acc_ref[...] += jnp.where(valid, val, 0.0)

    # single cross-lane reduce + lane-dense write, only on the last tile
    @pl.when(i == pl.num_programs(1) - 1)
    def _():
        total = jnp.sum(acc_ref[...])
        out_ref[...] = jnp.broadcast_to(total, (1, 128))


def exp_log_cross_entropy_loss(cls_score, label, class_weight=None,
                               gamma=0.3, loss_weight=1.0, reduction='mean',
                               tm=2048):
    """cls_score: (N, C, H, W); label: (N, H, W) int; class_weight: (C,) or None."""
    n, c, h, w = cls_score.shape
    hw = h * w
    m_total = n * hw

    # pixel-tile (lane) size: multiple of 128, no larger than the 128-rounded row
    tm = max(128, min(int(tm), pl.cdiv(hw, 128) * 128))
    n_tiles = pl.cdiv(hw, tm)

    # free, contiguous reshapes only (no transpose, no pad, no dtype upcast)
    x3 = cls_score.reshape(n, c, hw)
    lab3 = label.reshape(n, 1, hw).astype(jnp.int32)
    if class_weight is None:
        w3 = jnp.ones((n, 1, hw), jnp.float32)
    else:
        cw = jnp.asarray(class_weight, jnp.float32)
        w3 = cw[label.reshape(n, hw).astype(jnp.int32)].reshape(n, 1, hw)

    kernel = partial(_exp_log_ce_kernel, n_classes=c, hw=hw, tm=tm, gamma=gamma)

    partials = pl.pallas_call(
        kernel,
        out_shape=jax.ShapeDtypeStruct((n, 1, 128), jnp.float32),
        grid=(n, n_tiles),
        in_specs=[
            pl.BlockSpec((None, c, tm), lambda b, i: (b, 0, i)),   # logits tile
            pl.BlockSpec((None, 1, tm), lambda b, i: (b, 0, i)),   # labels tile
            pl.BlockSpec((None, 1, tm), lambda b, i: (b, 0, i)),   # per-pixel weight tile
        ],
        out_specs=pl.BlockSpec((None, 1, 128), lambda b, i: (b, 0, 0)),
        scratch_shapes=[pltpu.VMEM((1, tm), jnp.float32)],
        compiler_params=pltpu.CompilerParams(
            dimension_semantics=("parallel", "arbitrary")),
    )(x3, lab3, w3)

    total = jnp.sum(partials[:, 0, 0])
    if reduction == 'mean':
        return total * (loss_weight / m_total)
    elif reduction == 'sum':
        return total * loss_weight
    # TODO(synk): reduction='none' (per-pixel loss output) not implemented in-kernel.
    raise NotImplementedError("reduction='none' is not supported")


def _reference(cls_score, label, class_weight, gamma=0.3, loss_weight=1.0):
    logp = jax.nn.log_softmax(cls_score.astype(jnp.float32), axis=1)
    gathered = jnp.take_along_axis(
        logp, label[:, None, :, :].astype(jnp.int32), axis=1)[:, 0]
    v = jnp.power(jnp.maximum(-gathered, 1e-9), gamma) * class_weight[label]
    return loss_weight * v.mean()


if __name__ == "__main__":
    key = jax.random.PRNGKey(0)
    k1, k2 = jax.random.split(key)

    N, C, H, W = 2, 4, 16, 16
    cls_score = jax.random.normal(k1, (N, C, H, W), dtype=jnp.float32)
    label = jax.random.randint(k2, (N, H, W), 0, C, dtype=jnp.int32)
    # deterministic "class_weight" parameter (the only configurable weight in __init__)
    class_weight = jnp.linspace(0.5, 1.5, C, dtype=jnp.float32)

    gamma, loss_weight = 0.3, 1.0

    loss = exp_log_cross_entropy_loss(cls_score, label, class_weight,
                                      gamma=gamma, loss_weight=loss_weight)
    loss = jax.block_until_ready(loss)

    ref = _reference(cls_score, label, class_weight, gamma=gamma, loss_weight=loss_weight)
    assert jnp.allclose(loss, ref, rtol=1e-5, atol=1e-5), (loss, ref)

    print("KERNEL_OK")
</pallas_src>

<mosaic_0001>
module attributes {stable_mosaic.version = 11 : i64} {
  func.func @_exp_log_ce_kernel(%arg0: i32, %arg1: i32, %arg2: memref<1x4x256xf32, #tpu.memory_space<vmem>>, %arg3: memref<1x1x256xi32, #tpu.memory_space<vmem>>, %arg4: memref<1x1x256xf32, #tpu.memory_space<vmem>>, %arg5: memref<1x1x128xf32, #tpu.memory_space<vmem>>, %arg6: memref<1x256xf32, #tpu.memory_space<vmem>>) attributes {dimension_semantics = [#tpu.dimension_semantics<parallel>, #tpu.dimension_semantics<arbitrary>], iteration_bounds = array<i64: 2, 1>, scalar_prefetch = 0 : i64, scratch_operands = 1 : i64, tpu.core_type = #tpu.core_type<tc>, window_params = [{transform_indices = @transform_0, window_bounds = array<i64: 1, 4, 256>}, {transform_indices = @transform_1, window_bounds = array<i64: 1, 1, 256>}, {transform_indices = @transform_2, window_bounds = array<i64: 1, 1, 256>}, {transform_indices = @transform_3, window_bounds = array<i64: 1, 1, 128>}]} {
    %c0_i32 = arith.constant 0 : i32
    %0 = arith.cmpi eq, %arg1, %c0_i32 : i32
    %1 = arith.extui %0 : i1 to i32
    %c0_i32_0 = arith.constant 0 : i32
    %2 = arith.cmpi ne, %1, %c0_i32_0 : i32
    scf.if %2 {
      %cst_22 = arith.constant 0.000000e+00 : f32
      %45 = vector.broadcast %cst_22 : f32 to vector<1x256xf32>
      %c0_23 = arith.constant 0 : index
      %c0_24 = arith.constant 0 : index
      %46 = vector.load %arg6[%c0_23, %c0_24] : memref<1x256xf32, #tpu.memory_space<vmem>>, vector<1x256xf32>
      tpu.vector_store %arg6[%c0_23, %c0_24], %45 {strides = array<i32>} : memref<1x256xf32, #tpu.memory_space<vmem>>, vector<1x256xf32>,
    } else {
    }
    %c0 = arith.constant 0 : index
    %c0_1 = arith.constant 0 : index
    %c0_2 = arith.constant 0 : index
    %3 = vector.load %arg2[%c0, %c0_1, %c0_2] : memref<1x4x256xf32, #tpu.memory_space<vmem>>, vector<1x4x256xf32>
    %4 = vector.shape_cast %3 : vector<1x4x256xf32> to vector<4x256xf32>
    %c0_3 = arith.constant 0 : index
    %c0_4 = arith.constant 0 : index
    %c0_5 = arith.constant 0 : index
    %5 = vector.load %arg3[%c0_3, %c0_4, %c0_5] : memref<1x1x256xi32, #tpu.memory_space<vmem>>, vector<1x1x256xi32>
    %6 = vector.shape_cast %5 : vector<1x1x256xi32> to vector<1x256xi32>
    %c0_6 = arith.constant 0 : index
    %c0_7 = arith.constant 0 : index
    %c0_8 = arith.constant 0 : index
    %7 = vector.load %arg4[%c0_6, %c0_7, %c0_8] : memref<1x1x256xf32, #tpu.memory_space<vmem>>, vector<1x1x256xf32>
    %8 = vector.shape_cast %7 : vector<1x1x256xf32> to vector<1x256xf32>
    %9 = tpu.iota {dimensions = array<i32: 0>} : vector<4x256xi32>
    %10 = vector.broadcast %6 : vector<1x256xi32> to vector<4x256xi32>
    %11 = arith.cmpi eq, %9, %10 : vector<4x256xi32>
    %cst = arith.constant dense<0xFF800000> : vector<256xf32>
    %12 = vector.multi_reduction <maximumf>, %4, %cst [0] : vector<4x256xf32> to vector<256xf32>
    %13 = vector.shape_cast %12 : vector<256xf32> to vector<1x256xf32>
    %14 = vector.broadcast %13 : vector<1x256xf32> to vector<4x256xf32>
    %15 = arith.subf %4, %14 : vector<4x256xf32>
    %16 = math.exp %15 : vector<4x256xf32>
    %cst_9 = arith.constant dense<0.000000e+00> : vector<256xf32>
    %17 = vector.multi_reduction <add>, %16, %cst_9 [0] : vector<4x256xf32> to vector<256xf32>
    %18 = vector.shape_cast %17 : vector<256xf32> to vector<1x256xf32>
    %19 = math.log %18 : vector<1x256xf32>
    %20 = arith.addf %13, %19 : vector<1x256xf32>
    %cst_10 = arith.constant 0.000000e+00 : f32
    %21 = vector.broadcast %cst_10 : f32 to vector<4x256xf32>
    %22 = arith.select %11, %4, %21 : vector<4x256xi1>, vector<4x256xf32>
    %cst_11 = arith.constant dense<0.000000e+00> : vector<256xf32>
    %23 = vector.multi_reduction <add>, %22, %cst_11 [0] : vector<4x256xf32> to vector<256xf32>
    %24 = vector.shape_cast %23 : vector<256xf32> to vector<1x256xf32>
    %25 = arith.subf %20, %24 : vector<1x256xf32>
    %cst_12 = arith.constant 9.99999971E-10 : f32
    %26 = vector.broadcast %cst_12 : f32 to vector<1x256xf32>
    %27 = arith.maximumf %25, %26 : vector<1x256xf32>
    %cst_13 = arith.constant 3.000000e-01 : f32
    %28 = vector.broadcast %cst_13 : f32 to vector<1x256xf32>
    %29 = math.powf %27, %28 : vector<1x256xf32>
    %30 = arith.mulf %29, %8 : vector<1x256xf32>
    %31 = tpu.iota {dimensions = array<i32: 1>} : vector<1x256xi32>
    %c256_i32 = arith.constant 256 : i32
    %32 = arith.muli %arg1, %c256_i32 : i32
    %33 = vector.broadcast %32 : i32 to vector<1x256xi32>
    %34 = arith.addi %33, %31 : vector<1x256xi32>
    %c256_i32_14 = arith.constant 256 : i32
    %35 = vector.broadcast %c256_i32_14 : i32 to vector<1x256xi32>
    %36 = arith.cmpi slt, %34, %35 : vector<1x256xi32>
    %c0_15 = arith.constant 0 : index
    %c0_16 = arith.constant 0 : index
    %37 = vector.load %arg6[%c0_15, %c0_16] : memref<1x256xf32, #tpu.memory_space<vmem>>, vector<1x256xf32>
    %cst_17 = arith.constant 0.000000e+00 : f32
    %38 = vector.broadcast %cst_17 : f32 to vector<1x256xf32>
    %39 = arith.select %36, %30, %38 : vector<1x256xi1>, vector<1x256xf32>
    %40 = arith.addf %37, %39 : vector<1x256xf32>
    %c0_18 = arith.constant 0 : index
    %c0_19 = arith.constant 0 : index
    %41 = vector.load %arg6[%c0_18, %c0_19] : memref<1x256xf32, #tpu.memory_space<vmem>>, vector<1x256xf32>
    tpu.vector_store %arg6[%c0_18, %c0_19], %40 {strides = array<i32>} : memref<1x256xf32, #tpu.memory_space<vmem>>, vector<1x256xf32>,
    %c0_i32_20 = arith.constant 0 : i32
    %42 = arith.cmpi eq, %arg1, %c0_i32_20 : i32
    %43 = arith.extui %42 : i1 to i32
    %c0_i32_21 = arith.constant 0 : i32
    %44 = arith.cmpi ne, %43, %c0_i32_21 : i32
    scf.if %44 {
      %c0_22 = arith.constant 0 : index
      %c0_23 = arith.constant 0 : index
      %45 = vector.load %arg6[%c0_22, %c0_23] : memref<1x256xf32, #tpu.memory_space<vmem>>, vector<1x256xf32>
      %46 = vector.shape_cast %45 : vector<1x256xf32> to vector<1x1x256xf32>
      %cst_24 = arith.constant dense<0.000000e+00> : vector<1xf32>
      %47 = vector.multi_reduction <add>, %46, %cst_24 [1, 2] : vector<1x1x256xf32> to vector<1xf32>
      %48 = vector.shape_cast %47 : vector<1xf32> to vector<1x1x1xf32>
      %49 = vector.extract %48[0, 0, 0] : f32 from vector<1x1x1xf32>
      %50 = vector.broadcast %49 : f32 to vector<1x128xf32>
      %c0_25 = arith.constant 0 : index
      %c0_26 = arith.constant 0 : index
      %c0_27 = arith.constant 0 : index
      %51 = vector.load %arg5[%c0_25, %c0_26, %c0_27] : memref<1x1x128xf32, #tpu.memory_space<vmem>>, vector<1x1x128xf32>
      %52 = vector.shape_cast %51 : vector<1x1x128xf32> to vector<1x128xf32>
      %53 = vector.shape_cast %50 : vector<1x128xf32> to vector<1x1x128xf32>
      tpu.vector_store %arg5[%c0_25, %c0_26, %c0_27], %53 {strides = array<i32>} : memref<1x1x128xf32, #tpu.memory_space<vmem>>, vector<1x1x128xf32>,
    } else {
    }
    return
  }
  func.func @transform_0(%arg0: i32, %arg1: i32) -> (i32, i32, i32) {
    %c0_i32 = arith.constant 0 : i32
    %c0_i32_0 = arith.constant 0 : i32
    return %arg0, %c0_i32, %arg1 : i32, i32, i32
  }
  func.func @transform_1(%arg0: i32, %arg1: i32) -> (i32, i32, i32) {
    %c0_i32 = arith.constant 0 : i32
    %c0_i32_0 = arith.constant 0 : i32
    return %arg0, %c0_i32, %arg1 : i32, i32, i32
  }
  func.func @transform_2(%arg0: i32, %arg1: i32) -> (i32, i32, i32) {
    %c0_i32 = arith.constant 0 : i32
    %c0_i32_0 = arith.constant 0 : i32
    return %arg0, %c0_i32, %arg1 : i32, i32, i32
  }
  func.func @transform_3(%arg0: i32, %arg1: i32) -> (i32, i32, i32) {
    %c0_i32 = arith.constant 0 : i32
    %c0_i32_0 = arith.constant 0 : i32
    %c0_i32_1 = arith.constant 0 : i32
    return %arg0, %c0_i32, %c0_i32_0 : i32, i32, i32
  }
}

</mosaic_0001>

<llo_original>
// kernel: tpu_custom_call.1
$region0: #{tpu_custom_call.1}
  #allocation0 [shape = 'u32[]', space=smem, size = 0x4, offset = 0x4, fixed_abs, tag = 'smem constant byte address 0x4 - core index']
  #allocation1 [shape = 'u32[144,128]{1,0:T(1,128)}', space=vmem, size = 0x12000, scoped, tag = 'internal scratch']
  #allocation2 [shape = 'f32[1,256]{1,0:T(1,128)}', space=vmem, size = 0x400, scoped, tag = 'scratch operand']
  %s0 = inlined_call_operand.hbm [shape: f32[2,4,256], index: 0, kind: input, shape index: {}]
  %s1 = inlined_call_operand.hbm [shape: s32[2,1,256], index: 1, kind: input, shape index: {}]
  %s2 = inlined_call_operand.vmem [shape: f32[2,1,256], index: 2, kind: input, shape index: {}]
  %s3 = inlined_call_operand.hbm [shape: f32[2,1,128], index: 3, kind: output, shape index: {}]
  %s4 = sld [smem:[#allocation0]]
  $region61: #{tpu_custom_call.1} parent=0
    _
  %s6 = ssub.s32 1, %s4
  %s7 = scalar_select 0, %s6, %s4
  $region1: #{tpu_custom_call.1} parent=0
    #allocation3 [shape = 'u8[8192]{0}', space=vmem, size = 0x2000, scoped, tag = 'input window, operand 0']
    #allocation4 [shape = 's32[2]{0}', space=sflag, size = 0x8, scoped, tag = 'scoped memory for tpu_custom_call.1']
    #allocation5 [shape = 's32[2]{0}', space=sflag, size = 0x8, scoped, tag = 'scoped memory for tpu_custom_call.1']
    #allocation6 [shape = 'u8[2048]{0}', space=vmem, size = 0x800, scoped, tag = 'input window, operand 1']
    #allocation7 [shape = 's32[2]{0}', space=sflag, size = 0x8, scoped, tag = 'scoped memory for tpu_custom_call.1']
    #allocation8 [shape = 'u8[1024]{0}', space=vmem, size = 0x400, scoped, tag = 'output window, operand 0']
    %8 = vsyncpa [#allocation4], 0
    %s9 = scalar_lea.sflag [#allocation4], 1
    %10 = vsyncpa %s9, 0
    %11 = vsyncpa [#allocation7], 0
    %s12 = scalar_lea.sflag [#allocation7], 1
    %13 = vsyncpa %s12, 0
    %14 = vsyncpa [#allocation5], 0
    %s15 = scalar_lea.sflag [#allocation5], 1
    %16 = vsyncpa %s15, 0
    loop: start=0, step=1, limit=4
    $region2: #{tpu_custom_call.1} parent=1 // loop_pre_header
      _
    $region3: #{tpu_custom_call.1} parent=1 // loop_header
      %s18 = sphi 0, %s22
      %p19 = scmp.ge.s32.totalorder %s18, 4
      %s25 = sphi 0, %s37
      %s26 = sphi 0, %s33
      %s27 = sphi 0, %s25
      %s28 = sphi 0, %s26
      %s29 = sphi 0, %s27
      %s30 = sphi 0, %s28
      %s42 = sphi 0, %s44
      %s45 = sphi 0, %s42
      %s46 = sphi 0, %s45
      %s62 = sphi 0, %s46
      %s70 = sphi 0, %s72
      %s73 = sphi 0, %s70
      %s74 = sphi 0, %s73
      %s90 = sphi 0, %s74
      %s98 = sphi 0, %s100
      %s101 = sphi 0, %s98
      %s102 = sphi 0, %s101
      %s118 = sphi 0, %s102
      %s124 = sphi 0, %s126
      %s127 = sphi 0, %s124
      %s128 = sphi 0, %s127
      %s144 = sphi 0, %s128
    $region4: #{tpu_custom_call.1} parent=1 // loop_header_branch
      %21 = sbr.rel (%p19) target = $region8
    $region5: #{tpu_custom_call.1} parent=1 // loop_body
      %s23 = ssub.s32 %s18, 1
      %s24 = ssub.s32 %s18, 2
      %s31 = sadd.s32 1, %s26
      %p32 = scmp.ge.s32.totalorder %s31, 1
      %s33 = scalar_select %p32, 0, %s31
      %s34 = sadd.s32 1, %s25
      %s35 = scalar_select %p32, %s34, %s25
      %p36 = scmp.ge.s32.totalorder %s35, 2
      %s37 = scalar_select %p36, 0, %s35
      %s38 = ssub.s32 %s25, %s37
      %s39 = ssub.s32 %s26, %s33
      %s40 = sor.u32 %s38, %s39
      %p41 = scmp.eq.s32.totalorder %s40, 0
      %s43 = sadd.s32 %s42, 1
      %s44 = scalar_select %p41, %s42, %s43
      %p47 = pneg %p41
      %p48 = scmp.eq.s32.totalorder %s18, 1
      %p49 = por %p47, %p48
      %p50 = scmp.ne.s32.totalorder %s42, %s45
      %p51 = scmp.eq.s32.totalorder %s18, 0
      %p52 = por %p50, %p51
      %p53 = scmp.ne.s32.totalorder %s42, %s45
      %p54 = scmp.eq.s32.totalorder %s23, 1
      %p55 = por %p53, %p54
      %p56 = scmp.ne.s32.totalorder %s45, %s46
      %p57 = scmp.eq.s32.totalorder %s23, 0
      %p58 = por %p56, %p57
      %p59 = scmp.ne.s32.totalorder %s45, %s46
      %p60 = scmp.eq.s32.totalorder %s24, 1
      %p61 = por %p59, %p60
      %p63 = scmp.ne.s32.totalorder %s46, %s62
      %p64 = scmp.eq.s32.totalorder %s24, 0
      %p65 = por %p63, %p64
      %s66 = ssub.s32 %s25, %s37
      %s67 = ssub.s32 %s26, %s33
      %s68 = sor.u32 %s66, %s67
      %p69 = scmp.eq.s32.totalorder %s68, 0
      %s71 = sadd.s32 %s70, 1
      %s72 = scalar_select %p69, %s70, %s71
      %p75 = pneg %p69
      %p76 = scmp.eq.s32.totalorder %s18, 1
      %p77 = por %p75, %p76
      %p78 = scmp.ne.s32.totalorder %s70, %s73
      %p79 = scmp.eq.s32.totalorder %s18, 0
      %p80 = por %p78, %p79
      %p81 = scmp.ne.s32.totalorder %s70, %s73
      %p82 = scmp.eq.s32.totalorder %s23, 1
      %p83 = por %p81, %p82
      %p84 = scmp.ne.s32.totalorder %s73, %s74
      %p85 = scmp.eq.s32.totalorder %s23, 0
      %p86 = por %p84, %p85
      %p87 = scmp.ne.s32.totalorder %s73, %s74
      %p88 = scmp.eq.s32.totalorder %s24, 1
      %p89 = por %p87, %p88
      %p91 = scmp.ne.s32.totalorder %s74, %s90
      %p92 = scmp.eq.s32.totalorder %s24, 0
      %p93 = por %p91, %p92
      %s94 = ssub.s32 %s25, %s37
      %s95 = ssub.s32 %s26, %s33
      %s96 = sor.u32 %s94, %s95
      %p97 = scmp.eq.s32.totalorder %s96, 0
      %s99 = sadd.s32 %s98, 1
      %s100 = scalar_select %p97, %s98, %s99
      %p103 = pneg %p97
      %p104 = scmp.eq.s32.totalorder %s18, 1
      %p105 = por %p103, %p104
      %p106 = scmp.ne.s32.totalorder %s98, %s101
      %p107 = scmp.eq.s32.totalorder %s18, 0
      %p108 = por %p106, %p107
      %p109 = scmp.ne.s32.totalorder %s98, %s101
      %p110 = scmp.eq.s32.totalorder %s23, 1
      %p111 = por %p109, %p110
      %p112 = scmp.ne.s32.totalorder %s101, %s102
      %p113 = scmp.eq.s32.totalorder %s23, 0
      %p114 = por %p112, %p113
      %p115 = scmp.ne.s32.totalorder %s101, %s102
      %p116 = scmp.eq.s32.totalorder %s24, 1
      %p117 = por %p115, %p116
      %p119 = scmp.ne.s32.totalorder %s102, %s118
      %p120 = scmp.eq.s32.totalorder %s24, 0
      %p121 = por %p119, %p120
      %s122 = ssub.s32 %s25, %s37
      %p123 = scmp.eq.s32.totalorder %s122, 0
      %s125 = sadd.s32 %s124, 1
      %s126 = scalar_select %p123, %s124, %s125
      %p129 = pneg %p123
      %p130 = scmp.eq.s32.totalorder %s18, 1
      %p131 = por %p129, %p130
      %p132 = scmp.ne.s32.totalorder %s124, %s127
      %p133 = scmp.eq.s32.totalorder %s18, 0
      %p134 = por %p132, %p133
      %p135 = scmp.ne.s32.totalorder %s124, %s127
      %p136 = scmp.eq.s32.totalorder %s23, 1
      %p137 = por %p135, %p136
      %p138 = scmp.ne.s32.totalorder %s127, %s128
      %p139 = scmp.eq.s32.totalorder %s23, 0
      %p140 = por %p138, %p139
      %p141 = scmp.ne.s32.totalorder %s127, %s128
      %p142 = scmp.eq.s32.totalorder %s24, 1
      %p143 = por %p141, %p142
      %p145 = scmp.ne.s32.totalorder %s128, %s144
      %p146 = scmp.eq.s32.totalorder %s24, 0
      %p147 = por %p145, %p146
      %p148 = scmp.le.s32.totalorder 1, %s18
      %p149 = scmp.lt.s32.totalorder %s18, 3
      %p150 = pnand %p148, %p149
      %p151 = pneg %p150
      // Predicated region
      $region9: #{tpu_custom_call.1} parent=5 // pred_check
        _
      $region10: #{tpu_custom_call.1} parent=5 // pred_check_branch
        %153 = sbr.rel (%p150) target = $region12
      $region11: #{tpu_custom_call.1} parent=5 // pred_region
        %s154 = ssub.s32 %s18, 1
      $region12: #{tpu_custom_call.1} parent=5 // pred_fallthru
        _
      %p155 = scmp.lt.s32.totalorder %s18, 2
      // Predicated region
      $region13: #{tpu_custom_call.1} parent=5 // pred_check
        %p156 = pneg %p155
      $region14: #{tpu_custom_call.1} parent=5 // pred_check_branch
        %158 = sbr.rel (%p156) target = $region16
      $region15: #{tpu_custom_call.1} parent=5 // pred_region
        // Predicated region
        $region17: #{tpu_custom_call.1} parent=15 // pred_check
          %p159 = pneg %p52
        $region18: #{tpu_custom_call.1} parent=15 // pred_check_branch
          %161 = sbr.rel (%p159) target = $region20
        $region19: #{tpu_custom_call.1} parent=15 // pred_region
          %s162 = sand.u32 %s42, 1
          %s163 = scalar_lea.sflag [#allocation4], %s162
          %s164 = sand.u32 %s42, 1
          %s165 = smul.addr %s164, 8
          %s166 = scalar_lea.vmem [#allocation3], %s165
          %s167 = smul.u32 2, %s26
          %s169 = ssub.s32 128, 128
          %170 = vsyncadd %s163, %s169
          %s171 = smul.addr %s25, 2
          %s172 = sadd.s32 %s167, %s171
          %s173 = smul.addr %s172, 64
          %s174 = scalar_lea.hbm %s0, %s173
          %s176 = sshll.u32 %s166, 4
          %s177 = int_to_ptr.vmem [resolvable:$true] %s176
          %179 = dma.hbm_to_vmem [thread:$0]  %s174, 128, %s177, %s163
        $region20: #{tpu_custom_call.1} parent=15 // pred_fallthru
          _
        // Predicated region
        $region21: #{tpu_custom_call.1} parent=15 // pred_check
          %p180 = pneg %p80
        $region22: #{tpu_custom_call.1} parent=15 // pred_check_branch
          %182 = sbr.rel (%p180) target = $region24
        $region23: #{tpu_custom_call.1} parent=15 // pred_region
          %s183 = sand.u32 %s70, 1
          %s184 = scalar_lea.sflag [#allocation7], %s183
          %s185 = sand.u32 %s70, 1
          %s186 = smul.addr %s185, 2
          %s187 = scalar_lea.vmem [#allocation6], %s186
          %s188 = smul.u32 2, %s26
          %s190 = ssub.s32 32, 32
          %191 = vsyncadd %s184, %s190
          %s192 = smul.addr %s25, 2
          %s193 = sadd.s32 %s188, %s192
          %s194 = smul.addr %s193, 16
          %s195 = scalar_lea.hbm %s1, %s194
          %s197 = sshll.u32 %s187, 4
          %s198 = int_to_ptr.vmem [resolvable:$true] %s197
          %200 = dma.hbm_to_vmem [thread:$0]  %s195, 32, %s198, %s184
        $region24: #{tpu_custom_call.1} parent=15 // pred_fallthru
          _
        // Predicated region
        $region25: #{tpu_custom_call.1} parent=15 // pred_check
          %p201 = pneg %p108
        $region26: #{tpu_custom_call.1} parent=15 // pred_check_branch
          %203 = sbr.rel (%p201) target = $region28
        $region27: #{tpu_custom_call.1} parent=15 // pred_region
          %s204 = smul.u32 2, %s26
          %p205 = scmp.lt.s32.totalorder %s25, 1
          %s206 = scalar_select %p205, %s25, 1
          %p207 = scmp.lt.s32.totalorder %s204, 1
          %s208 = scalar_select %p207, %s204, 1
          %s209 = smul.addr %s206, 2
          %s210 = sadd.s32 %s208, %s209
          %s211 = scalar_lea.vmem %s2, %s210
          %s212 = smul.u32 2, %s26
        $region28: #{tpu_custom_call.1} parent=15 // pred_fallthru
          _
      $region16: #{tpu_custom_call.1} parent=5 // pred_fallthru
        _
      %p213 = scmp.le.s32.totalorder 1, %s18
      %p214 = scmp.lt.s32.totalorder %s18, 3
      %p215 = pnand %p213, %p214
      %p216 = pneg %p215
      // Predicated region
      $region29: #{tpu_custom_call.1} parent=5 // pred_check
        _
      $region30: #{tpu_custom_call.1} parent=5 // pred_check_branch
        %218 = sbr.rel (%p215) target = $region32
      $region31: #{tpu_custom_call.1} parent=5 // pred_region
        %s219 = ssub.s32 %s18, 1
        %s220 = sand.u32 %s45, 1
        %s221 = scalar_lea.sflag [#allocation4], %s220
        %s222 = sand.u32 %s45, 1
        %s223 = smul.addr %s222, 8
        %s224 = scalar_lea.vmem [#allocation3], %s223
        // Predicated region
        $region33: #{tpu_custom_call.1} parent=31 // pred_check
          %p225 = pneg %p58
        $region34: #{tpu_custom_call.1} parent=31 // pred_check_branch
          %227 = sbr.rel (%p225) target = $region36
        $region35: #{tpu_custom_call.1} parent=31 // pred_region
          %228 = dma.done %s221, 128
        $region36: #{tpu_custom_call.1} parent=31 // pred_fallthru
          _
        %s229 = sand.u32 %s73, 1
        %s230 = scalar_lea.sflag [#allocation7], %s229
        %s231 = sand.u32 %s73, 1
        %s232 = smul.addr %s231, 2
        %s233 = scalar_lea.vmem [#allocation6], %s232
        // Predicated region
        $region37: #{tpu_custom_call.1} parent=31 // pred_check
          %p234 = pneg %p86
        $region38: #{tpu_custom_call.1} parent=31 // pred_check_branch
          %236 = sbr.rel (%p234) target = $region40
        $region39: #{tpu_custom_call.1} parent=31 // pred_region
          %237 = dma.done %s230, 32
        $region40: #{tpu_custom_call.1} parent=31 // pred_fallthru
          _
        %s238 = sand.u32 %s45, 1
        %s239 = scalar_lea.sflag [#allocation4], %s238
        %s240 = sand.u32 %s45, 1
        %s241 = smul.addr %s240, 8
        %s242 = scalar_lea.vmem [#allocation3], %s241
        %p243 = pneg %p58
        %p244 = pneg %p55
        %s245 = sand.u32 %s73, 1
        %s246 = scalar_lea.sflag [#allocation7], %s245
        %s247 = sand.u32 %s73, 1
        %s248 = smul.addr %s247, 2
        %s249 = scalar_lea.vmem [#allocation6], %s248
        %p250 = pneg %p86
        %p251 = pneg %p83
        %s252 = smul.u32 2, %s28
        %p253 = scmp.lt.s32.totalorder %s27, 1
        %s254 = scalar_select %p253, %s27, 1
        %p255 = scmp.lt.s32.totalorder %s252, 1
        %s256 = scalar_select %p255, %s252, 1
        %s257 = smul.addr %s254, 2
        %s258 = sadd.s32 %s256, %s257
        %s259 = scalar_lea.vmem %s2, %s258
        %p260 = pneg %p114
        %p261 = pneg %p111
        %p262 = pneg %p140
        %p263 = pneg %p137
        %s264 = sand.u32 %s127, 1
        %s265 = scalar_lea.sflag [#allocation5], %s264
        %s266 = sand.u32 %s127, 1
        %s267 = scalar_lea.vmem [#allocation8], %s266
        %s268 = smul.u32 2, %s28
        %s269 = smul.u32 2, %s28
        %s270 = smul.u32 2, %s28
        %p271 = scmp.lt.s32.totalorder %s27, 1
        %s272 = scalar_select %p271, %s27, 1
        %p273 = scmp.lt.s32.totalorder %s270, 1
        %s274 = scalar_select %p273, %s270, 1
        %s275 = smul.addr %s272, 2
        %s276 = sadd.s32 %s274, %s275
        %s277 = scalar_lea.vmem %s2, %s276
        %s278 = smul.u32 2, %s28
        %p279 = scmp.eq.s32.totalorder %s28, 0
        // Predicated region
        $region41: #{tpu_custom_call.1} parent=31 // pred_check
          %p280 = pneg %p279
        $region42: #{tpu_custom_call.1} parent=31 // pred_check_branch
          %282 = sbr.rel (%p280) target = $region44
        $region43: #{tpu_custom_call.1} parent=31 // pred_region
          %v283 = vlaneseq
          %vm284 = vcmp.ge.s32.totalorder %v283, 0
          %vm285 = vcmp.lt.s32.totalorder %v283, 256
          %vm286 = vmand %vm284, %vm285
          %287 = vst.msk [vmem:[#allocation2] sm:$0x3] %vm286, 0.0
        $region44: #{tpu_custom_call.1} parent=31 // pred_fallthru
          _
        %v288 = vld [vmem:[%s224] sm:$0xff]
        %v289 = vld [vmem:[%s233] sm:$0x3]
        %v290 = vld [vmem:[%s277] sm:$0x3]
        %v291 = vlaneseq
        %v292 = vshrl.u32 %v291, 7
        %v293 = vlaneseq
        %v294 = vshrl.u32 %v293, 7
        %v295 = vsub.s32 0, %v294
        %v296 = vrot.slane %v289, %v295
        %v297 = vlaneseq
        %v298 = vshrl.u32 %v297, 7
        %v299 = vsub.s32 1, %v298
        %v300 = vrot.slane %v289, %v299
        %vm301 = vcmp.eq.s32.totalorder %v292, %v296
        %vm302 = vcmp.eq.s32.totalorder %v292, %v300
        %v304 = vcombine.high %v288, %v288
        %vm306 = vcmask 1043456
        %v307 = vsel %vm306, %v288, -inf
        %v308 = vrot.slane %v307, 4
        %v309 = vmax.f32 %v307, %v308
        %v310 = vrot.slane %v309, 2
        %v311 = vmax.f32 %v309, %v310
        %v312 = vrot.slane %v311, 1
        %v313 = vmax.f32 %v311, %v312
        %v314 = vsel %vm306, %v304, -inf
        %v315 = vrot.slane %v314, 4
        %v316 = vmax.f32 %v314, %v315
        %v317 = vrot.slane %v316, 2
        %v318 = vmax.f32 %v316, %v317
        %v319 = vrot.slane %v318, 1
        %v320 = vmax.f32 %v318, %v319
        %v323 = vcombine.low %v313, %v320
        %v325 = vsub.f32 %v288, %v323
        %v326 = vmul.f32 %v325, 1.442695
        %v327 = vpow.pop %v326
        %v329 = vcombine.high %v327, %v327
        %v331 = vsel %vm306, %v327, 0.0
        %v332 = vrot.slane %v331, 4
        %v333 = vadd.f32 %v331, %v332
        %v334 = vrot.slane %v333, 2
        %v335 = vadd.f32 %v333, %v334
        %v336 = vrot.slane %v335, 1
        %v337 = vadd.f32 %v335, %v336
        %v338 = vsel %vm306, %v329, 0.0
        %v339 = vrot.slane %v338, 4
        %v340 = vadd.f32 %v338, %v339
        %v341 = vrot.slane %v340, 2
        %v342 = vadd.f32 %v340, %v341
        %v343 = vrot.slane %v342, 1
        %v344 = vadd.f32 %v342, %v343
        %v345 = vlog2.pop %v337
        %v346 = vmul.f32 %v345, 0.6931472
        %v347 = vlog2.pop %v344
        %v348 = vmul.f32 %v347, 0.6931472
        %v349 = vadd.f32 %v313, %v346
        %v350 = vadd.f32 %v320, %v348
        %v351 = vsel %vm301, %v288, 0.0
        %v352 = vsel %vm302, %v304, 0.0
        %v353 = vsel %vm306, %v351, 0.0
        %v354 = vrot.slane %v353, 4
        %v355 = vadd.f32 %v353, %v354
        %v356 = vrot.slane %v355, 2
        %v357 = vadd.f32 %v355, %v356
        %v358 = vrot.slane %v357, 1
        %v359 = vadd.f32 %v357, %v358
        %v360 = vsel %vm306, %v352, 0.0
        %v361 = vrot.slane %v360, 4
        %v362 = vadd.f32 %v360, %v361
        %v363 = vrot.slane %v362, 2
        %v364 = vadd.f32 %v362, %v363
        %v365 = vrot.slane %v364, 1
        %v366 = vadd.f32 %v364, %v365
        %v367 = vsub.f32 %v349, %v359
        %v368 = vsub.f32 %v350, %v366
        %v369 = vmax.f32 %v367, 1e-09
        %v370 = vmax.f32 %v368, 1e-09
        %v371 = vpow.f32 %v369, 0.3
        %v372 = vpow.f32 %v370, 0.3
        %v374 = vlaneseq
        %v375 = vshrl.u32 %v374, 7
        %v376 = vsub.s32 0, %v375
        %v377 = vrot.slane %v290, %v376
        %v378 = vlaneseq
        %v379 = vshrl.u32 %v378, 7
        %v380 = vsub.s32 1, %v379
        %v381 = vrot.slane %v290, %v380
        %v384 = vmul.f32 %v371, %v377
        %v385 = vmul.f32 %v372, %v381
        %v386 = vlaneseq
        %v387 = vand.u32 %v386, 127
        %v388 = vadd.s32 %v387, 128
        %s389 = smul.u32 %s28, 256
        %v390 = vstv %s389
        %v391 = vadd.s32 %v390, %v387
        %v392 = vadd.s32 %v390, %v388
        %vm393 = vcmp.lt.s32.totalorder %v391, 256
        %vm394 = vcmp.lt.s32.totalorder %v392, 256
        %v395 = vld [vmem:[#allocation2] sm:$0x3]
        %v396 = vsel %vm393, %v384, 0.0
        %v397 = vsel %vm394, %v385, 0.0
        %v400 = vcombine.low %v396, %v397
        %v402 = vunpack.c.l.s4 1966171168
        %v403 = vunpack.c.0.s8 %v402
        %v404 = vlaneseq
        %v405 = vshrl.u32 %v404, 7
        %v406 = vsub.s32 %v403, %v405
        %v407 = vrot.slane %v400, %v406
        %v409 = vunpack.c.l.s4 1966171168
        %v410 = vunpack.c.0.s8 %v409
        %v411 = vlaneseq
        %v412 = vshrl.u32 %v411, 7
        %v413 = vsub.s32 %v410, %v412
        %v414 = vrot.slane %v407, %v413
        %v416 = vadd.f32 %v395, %v414
        %v417 = vlaneseq
        %vm418 = vcmp.ge.s32.totalorder %v417, 0
        %vm419 = vcmp.lt.s32.totalorder %v417, 256
        %vm420 = vmand %vm418, %vm419
        %421 = vst.msk [vmem:[#allocation2] sm:$0x3] %vm420, %v416
        // Predicated region
        $region45: #{tpu_custom_call.1} parent=31 // pred_check
          %p422 = pneg %p279
        $region46: #{tpu_custom_call.1} parent=31 // pred_check_branch
          %424 = sbr.rel (%p422) target = $region48
        $region47: #{tpu_custom_call.1} parent=31 // pred_region
          %v425 = vld [vmem:[#allocation2] sm:$0x3]
          %v427 = vlaneseq
          %v428 = vshrl.u32 %v427, 7
          %v429 = vsub.s32 0, %v428
          %v430 = vrot.slane %v425, %v429
          %v431 = vlaneseq
          %v432 = vshrl.u32 %v431, 7
          %v433 = vsub.s32 1, %v432
          %v434 = vrot.slane %v425, %v433
          %vm437 = vcmask 1040384
          %v438 = vsel %vm437, %v430, 0.0
          %v439 = vsel %vm437, %v434, 0.0
          %v440 = vadd.f32 %v438, %v439
          %441 = vadd.xlane.f32.xlu0 %v440
          %v442 = vpop.xlane.xlu0 %441
          %v443 = vrot.slane %v442, 4
          %v444 = vadd.f32 %v442, %v443
          %v445 = vrot.slane %v444, 2
          %v446 = vadd.f32 %v444, %v445
          %v447 = vrot.slane %v446, 1
          %v448 = vadd.f32 %v446, %v447
          %s449 = vtos %v448
          %v450 = vstv %s449
          %451 = vst [vmem:[%s267] sm:$0x1] %v450
        $region48: #{tpu_custom_call.1} parent=31 // pred_fallthru
          _
        %s452 = sand.u32 %s127, 1
        %s453 = scalar_lea.sflag [#allocation5], %s452
        %s454 = sand.u32 %s127, 1
        %s455 = scalar_lea.vmem [#allocation8], %s454
        // Predicated region
        $region49: #{tpu_custom_call.1} parent=31 // pred_check
          %p456 = pneg %p137
        $region50: #{tpu_custom_call.1} parent=31 // pred_check_branch
          %458 = sbr.rel (%p456) target = $region52
        $region51: #{tpu_custom_call.1} parent=31 // pred_region
          %s460 = ssub.s32 16, 16
          %461 = vsyncadd %s453, %s460
          %s462 = smul.addr %s27, 16
          %s463 = scalar_lea.hbm %s3, %s462
          %s465 = sshll.u32 %s455, 4
          %s466 = int_to_ptr.vmem [resolvable:$true] %s465
          %468 = dma.vmem_to_hbm [thread:$0]  %s466, 16, %s463, %s453
        $region52: #{tpu_custom_call.1} parent=31 // pred_fallthru
          _
      $region32: #{tpu_custom_call.1} parent=5 // pred_fallthru
        _
      %p469 = scmp.le.s32.totalorder 2, %s18
      // Predicated region
      $region53: #{tpu_custom_call.1} parent=5 // pred_check
        %p470 = pneg %p469
      $region54: #{tpu_custom_call.1} parent=5 // pred_check_branch
        %472 = sbr.rel (%p470) target = $region56
      $region55: #{tpu_custom_call.1} parent=5 // pred_region
        %s473 = ssub.s32 %s18, 2
        // Predicated region
        $region57: #{tpu_custom_call.1} parent=55 // pred_check
          %p474 = pneg %p143
        $region58: #{tpu_custom_call.1} parent=55 // pred_check_branch
          %476 = sbr.rel (%p474) target = $region60
        $region59: #{tpu_custom_call.1} parent=55 // pred_region
          %s477 = sand.u32 %s128, 1
          %s478 = scalar_lea.sflag [#allocation5], %s477
          %s479 = sand.u32 %s128, 1
          %s480 = scalar_lea.vmem [#allocation8], %s479
          %481 = dma.done %s478, 16
        $region60: #{tpu_custom_call.1} parent=55 // pred_fallthru
          _
      $region56: #{tpu_custom_call.1} parent=5 // pred_fallthru
        _
    $region6: #{tpu_custom_call.1} parent=1 // loop_footer
      %s22 = sadd.s32 1, %s18
    $region7: #{tpu_custom_call.1} parent=1 // loop_footer_branch
      %17 = sbr.rel target = $region3
    $region8: #{tpu_custom_call.1} parent=1 // loop_exit
      _
    %482 = vsyncpa [#allocation4], 1
    %s483 = scalar_lea.sflag [#allocation4], 1
    %484 = vsyncpa %s483, 1
    %485 = vsyncpa [#allocation7], 1
    %s486 = scalar_lea.sflag [#allocation7], 1
    %487 = vsyncpa %s486, 1
    %488 = vsyncpa [#allocation5], 1
    %s489 = scalar_lea.sflag [#allocation5], 1
    %490 = vsyncpa %s489, 1

</llo_original>
